<compile_context>
chip_gen: v7x
topology: tpu7x:2x2x1
jax: 0.10.0
libtpu: 0.0.40
codegen_flags: <defaults>
</compile_context>

<pallas_src>
import functools

import jax
import jax.numpy as jnp
import numpy as np
from jax.experimental import pallas as pl
from jax.experimental.pallas import tpu as pltpu


# ----------------------------------------------------------------------------
# Fused kernel: shared chain + mean + fused tail + all packed processors.
# ----------------------------------------------------------------------------
def _film_fused_kernel(x_ref, tr_ref,
                       w0_ref, b0_ref, wres_ref, bres_ref,
                       wtail_ref, btail_ref,
                       pw0s_ref, pw0t_ref, pb0_ref, pwres_ref, pbres_ref,
                       o_ref):
    # ---- shared_layer: Linear+ReLU, DRL1+ReLU, DRL2+ReLU (identity folded) ----
    x = x_ref[...].astype(jnp.bfloat16)                          # (B, input_dim)
    h = jnp.dot(x, w0_ref[...], preferred_element_type=jnp.float32) + b0_ref[...]
    h = jnp.maximum(h, 0.0)
    for i in range(2):                                           # (W.T + I) pre-folded
        h = jnp.dot(h.astype(jnp.bfloat16), wres_ref[i],
                    preferred_element_type=jnp.float32) + bres_ref[i]
        h = jnp.maximum(h, 0.0)

    # ---- batch mean (sublane sum on XLU, off the MXU) + fused linear tail:
    #      relu(mean(h) @ Wtail + btail) == shared_post(mean(DRL3(h))) ----
    B = x.shape[0]
    m = jnp.sum(h, axis=0, keepdims=True) * (1.0 / B)            # (1, M)
    s = jnp.dot(m.astype(jnp.bfloat16), wtail_ref[...],
                preferred_element_type=jnp.float32) + btail_ref[...]
    s = jnp.maximum(s, 0.0)                                      # (1, M)

    # ---- all P processors, packed; concat avoided via split first Linear.
    #      dot(tr, pw0t) has no dependence on the shared chain -> hides under it.
    tr = tr_ref[...].astype(jnp.bfloat16)
    hp = (jnp.dot(s.astype(jnp.bfloat16), pw0s_ref[...],
                  preferred_element_type=jnp.float32)
          + jnp.dot(tr, pw0t_ref[...], preferred_element_type=jnp.float32)
          + pb0_ref[...])                                        # (1, P*M)
    hp = jnp.maximum(hp, 0.0)
    for i in range(2):                                           # block-diag (W.T + I)
        hp = jnp.dot(hp.astype(jnp.bfloat16), pwres_ref[i],
                     preferred_element_type=jnp.float32) + pbres_ref[i]
        hp = jnp.maximum(hp, 0.0)

    # ---- last block-diag DRL with '(* reg + off)' folded into weight columns
    #      and bias: plain dot + bias -> lane-dense (1, P*M) unmasked store ----
    o_ref[...] = jnp.dot(hp.astype(jnp.bfloat16), pwres_ref[2],
                         preferred_element_type=jnp.float32) + pbres_ref[2]


def film_fused_forward(packed, x, task_representation):
    PM = packed["pb0"].shape[-1]
    M = packed["b0"].shape[-1]
    in_dim = packed["W0t"].shape[0]
    zg = packed["pw0_tr"].shape[0]
    B = x.shape[0]

    flops = 2 * (B * in_dim * M + 2 * B * M * M + M * M
                 + M * PM + zg * PM + 3 * PM * PM)
    bytes_accessed = (sum(int(np.prod(v.shape)) * v.dtype.itemsize
                          for v in packed.values())
                      + int(np.prod(x.shape)) * x.dtype.itemsize
                      + int(np.prod(task_representation.shape))
                      * task_representation.dtype.itemsize
                      + PM * 4)

    vmem = pl.BlockSpec(memory_space=pltpu.MemorySpace.VMEM)
    return pl.pallas_call(
        _film_fused_kernel,
        out_shape=jax.ShapeDtypeStruct((1, PM), jnp.float32),
        in_specs=[vmem] * 13,
        out_specs=vmem,
        cost_estimate=pl.CostEstimate(flops=flops, transcendentals=0,
                                      bytes_accessed=bytes_accessed),
    )(x, task_representation,
      packed["W0t"], packed["b0"], packed["WresT"], packed["bres"],
      packed["Wtail"], packed["btail"],
      packed["pw0_sh"], packed["pw0_tr"], packed["pb0"],
      packed["pwres_bd"], packed["pbres"])


# ----------------------------------------------------------------------------
# Whole forward under one jit: kernel + reshape only (no per-slice dispatch).
# ----------------------------------------------------------------------------
@functools.partial(jax.jit, static_argnames=("num_maps", "num_blocks"))
def film_ar_layer_forward(packed, x, task_representation, *, num_maps, num_blocks):
    out = film_fused_forward(packed, x, task_representation)    # (1, P*M)
    return out.reshape(num_blocks, 4, num_maps)                  # [g1, b1, g2, b2]


def unpack_block_params(out_array):
    """Host-side unpacking into the PyTorch-style list of dicts (one transfer)."""
    out = np.asarray(out_array)                                  # (num_blocks, 4, M)
    names = ("gamma1", "beta1", "gamma2", "beta2")
    return [{n: out[blk, j] for j, n in enumerate(names)}
            for blk in range(out.shape[0])]


# ----------------------------------------------------------------------------
# Parameter construction (deterministic, mimics nn.Linear default init).
# Raw params keep the PyTorch (out_features, in_features) layout for the
# pure-JAX reference; pack_params() builds the kernel-ready tensors once.
# ----------------------------------------------------------------------------
def init_linear(key, out_f, in_f):
    kw, kb = jax.random.split(key)
    bound = 1.0 / np.sqrt(in_f)
    W = jax.random.uniform(kw, (out_f, in_f), jnp.float32, -bound, bound)
    b = jax.random.uniform(kb, (1, out_f), jnp.float32, -bound, bound)
    return W, b


def build_params(key, input_dim, z_g_dim, num_maps, num_blocks):
    D = num_maps + z_g_dim
    keys = iter(jax.random.split(key, 256))

    # shared_layer + shared_layer_post
    W0, b0 = init_linear(next(keys), num_maps, input_dim)
    wr, br = [], []
    for _ in range(3):
        W, b = init_linear(next(keys), num_maps, num_maps)
        wr.append(W); br.append(b)
    Wres, bres = jnp.stack(wr), jnp.stack(br)            # (3,M,M), (3,1,M)
    Wpost, bpost = init_linear(next(keys), num_maps, num_maps)

    # processors: order per block is [gamma1, beta1, gamma2, beta2];
    # all four share the SAME regularizer tensor (as in the PyTorch __init__).
    pw0, pb0, pwres, pbres, regs, offs = [], [], [], [], [], []
    for _ in range(num_blocks):
        reg = jax.random.normal(next(keys), (num_maps,), jnp.float32) * 0.001
        for j in range(4):
            W, b = init_linear(next(keys), num_maps, D)
            pw0.append(W); pb0.append(b)
            wr, br = [], []
            for _ in range(3):
                W2, b2 = init_linear(next(keys), num_maps, num_maps)
                wr.append(W2); br.append(b2)
            pwres.append(jnp.stack(wr)); pbres.append(jnp.stack(br))
            regs.append(reg)
            offs.append(jnp.ones(num_maps, jnp.float32) if j in (0, 2)
                        else jnp.zeros(num_maps, jnp.float32))

    return dict(
        W0=W0, b0=b0, Wres=Wres, bres=bres, Wpost=Wpost, bpost=bpost,
        pw0=jnp.stack(pw0), pb0=jnp.stack(pb0),
        pwres=jnp.stack(pwres), pbres=jnp.stack(pbres),
        reg=jnp.stack(regs)[:, None, :], off=jnp.stack(offs)[:, None, :],
    )


def pack_params(params):
    """One-time host-side packing: pre-transpose, fold residual identities,
    compose the linear tail, fold the reg/off affine, convert weights to bf16,
    and pack all processors 128-wide (block-diagonal DRLs)."""
    W0 = np.asarray(params["W0"], np.float32)        # (M, input_dim)
    Wres = np.asarray(params["Wres"], np.float32)    # (3, M, M)
    bres = np.asarray(params["bres"], np.float32)    # (3, 1, M)
    Wpost = np.asarray(params["Wpost"], np.float32)  # (M, M)
    bpost = np.asarray(params["bpost"], np.float32)  # (1, M)
    pw0 = np.asarray(params["pw0"], np.float32)      # (P, M, D)
    pb0 = np.asarray(params["pb0"], np.float32)      # (P, 1, M)
    pwres = np.asarray(params["pwres"], np.float32)  # (P, 3, M, M)
    pbres = np.asarray(params["pbres"], np.float32)  # (P, 3, 1, M)
    reg = np.asarray(params["reg"], np.float32)      # (P, 1, M)
    off = np.asarray(params["off"], np.float32)      # (P, 1, M)

    M = W0.shape[0]
    P, _, D = pw0.shape
    PM = P * M
    I = np.eye(M, dtype=np.float32)

    # shared DRL1/DRL2 with the identity residual folded into the weight.
    WresT_plusI = np.stack([Wres[0].T + I, Wres[1].T + I])       # (2, M, M)
    bres01 = bres[:2]                                            # (2, 1, M)
    # fused linear tail: relu(mean(h) @ Wtail + btail) == post(mean(DRL3(h))).
    Wtail = (Wres[2].T + I) @ Wpost.T                            # (M, M)
    btail = bres[2] @ Wpost.T + bpost                            # (1, M)

    pw0_packed = np.zeros((D, PM), np.float32)       # concat-input -> packed out
    pb0_packed = np.zeros((1, PM), np.float32)
    pwres_bd = np.zeros((3, PM, PM), np.float32)     # block-diagonal DRL weights
    pbres_packed = np.zeros((3, 1, PM), np.float32)
    for p in range(P):
        sl = slice(p * M, (p + 1) * M)
        pw0_packed[:, sl] = pw0[p].T                 # (D, M) for x @ W
        pb0_packed[0, sl] = pb0[p, 0]
        pwres_bd[0][sl, sl] = pwres[p, 0].T + I
        pwres_bd[1][sl, sl] = pwres[p, 1].T + I
        # last DRL: fold (* reg + off) into column-scaled weights / fused bias.
        pwres_bd[2][sl, sl] = (pwres[p, 2].T + I) * reg[p, 0][None, :]
        pbres_packed[0, 0, sl] = pbres[p, 0, 0]
        pbres_packed[1, 0, sl] = pbres[p, 1, 0]
        pbres_packed[2, 0, sl] = pbres[p, 2, 0] * reg[p, 0] + off[p, 0]

    bf16 = jnp.bfloat16
    return dict(
        W0t=jnp.asarray(W0.T, bf16),                             # (input_dim, M)
        b0=jnp.asarray(params["b0"], jnp.float32),               # (1, M)
        WresT=jnp.asarray(WresT_plusI, bf16),                    # (2, M, M)
        bres=jnp.asarray(bres01, jnp.float32),                   # (2, 1, M)
        Wtail=jnp.asarray(Wtail, bf16),                          # (M, M)
        btail=jnp.asarray(btail, jnp.float32),                   # (1, M)
        pw0_sh=jnp.asarray(pw0_packed[:M], bf16),                # (M, P*M)
        pw0_tr=jnp.asarray(pw0_packed[M:], bf16),                # (z_g, P*M)
        pb0=jnp.asarray(pb0_packed, jnp.float32),                # (1, P*M)
        pwres_bd=jnp.asarray(pwres_bd, bf16),                    # (3, P*M, P*M)
        pbres=jnp.asarray(pbres_packed, jnp.float32),            # (3, 1, P*M)
    )


# ----------------------------------------------------------------------------
# Pure-JAX reference (uses the raw, unpacked f32 parameters).
# ----------------------------------------------------------------------------
def _ref_chain(x, W0, b0, Wres, bres):
    h = jax.nn.relu(x @ W0.T + b0)
    for i in range(3):
        h2 = h @ Wres[i].T + bres[i] + h
        h = jax.nn.relu(h2) if i < 2 else h2
    return h


def reference_forward(params, x, task_representation, num_blocks):
    h = _ref_chain(x, params["W0"], params["b0"], params["Wres"], params["bres"])
    m = jnp.mean(h, axis=0, keepdims=True)
    m = jax.nn.relu(m @ params["Wpost"].T + params["bpost"])
    xcat = jnp.concatenate([m, task_representation], axis=-1)
    outs = []
    P = params["pw0"].shape[0]
    for p in range(P):
        hp = _ref_chain(xcat, params["pw0"][p], params["pb0"][p],
                        params["pwres"][p], params["pbres"][p])
        outs.append(hp[0] * params["reg"][p, 0] + params["off"][p, 0])
    block_params = []
    for blk in range(num_blocks):
        base = blk * 4
        block_params.append({
            "gamma1": outs[base + 0], "beta1": outs[base + 1],
            "gamma2": outs[base + 2], "beta2": outs[base + 3],
        })
    return block_params


if __name__ == "__main__":
    input_dim, z_g_dim, num_maps, num_blocks = 32, 16, 16, 2   # P*M = 128 lanes
    batch = 8

    key = jax.random.PRNGKey(0)
    k_params, k_x, k_z = jax.random.split(key, 3)
    params = build_params(k_params, input_dim, z_g_dim, num_maps, num_blocks)
    packed = pack_params(params)

    x = jax.random.normal(k_x, (batch, input_dim), jnp.float32)
    task_representation = jax.random.normal(k_z, (1, z_g_dim), jnp.float32)

    out = film_ar_layer_forward(packed, x, task_representation,
                                num_maps=num_maps, num_blocks=num_blocks)
    jax.block_until_ready(out)
    result = unpack_block_params(out)          # host-side list-of-dicts unpacking

    ref = reference_forward(params, x, task_representation, num_blocks)
    for d, dr in zip(result, ref):
        for name in ("gamma1", "beta1", "gamma2", "beta2"):
            np.testing.assert_allclose(np.asarray(d[name]),
                                       np.asarray(dr[name]),
                                       rtol=1e-2, atol=1e-2)

    print("KERNEL_OK")
</pallas_src>

<mosaic_0001>
module attributes {stable_mosaic.version = 11 : i64} {
  func.func @_film_fused_kernel(%arg0: memref<8x32xf32, #tpu.memory_space<vmem>>, %arg1: memref<1x16xf32, #tpu.memory_space<vmem>>, %arg2: memref<32x16xbf16, #tpu.memory_space<vmem>>, %arg3: memref<1x16xf32, #tpu.memory_space<vmem>>, %arg4: memref<2x16x16xbf16, #tpu.memory_space<vmem>>, %arg5: memref<2x1x16xf32, #tpu.memory_space<vmem>>, %arg6: memref<16x16xbf16, #tpu.memory_space<vmem>>, %arg7: memref<1x16xf32, #tpu.memory_space<vmem>>, %arg8: memref<16x128xbf16, #tpu.memory_space<vmem>>, %arg9: memref<16x128xbf16, #tpu.memory_space<vmem>>, %arg10: memref<1x128xf32, #tpu.memory_space<vmem>>, %arg11: memref<3x128x128xbf16, #tpu.memory_space<vmem>>, %arg12: memref<3x1x128xf32, #tpu.memory_space<vmem>>, %arg13: memref<1x128xf32, #tpu.memory_space<vmem>>) attributes {dimension_semantics = [], scalar_prefetch = 0 : i64, scratch_operands = 0 : i64, tpu.core_type = #tpu.core_type<tc>} {
    %c0 = arith.constant 0 : index
    %c0_0 = arith.constant 0 : index
    %0 = vector.load %arg0[%c0, %c0_0] : memref<8x32xf32, #tpu.memory_space<vmem>>, vector<8x32xf32>
    %1 = arith.truncf %0 : vector<8x32xf32> to vector<8x32xbf16>
    %c0_1 = arith.constant 0 : index
    %c0_2 = arith.constant 0 : index
    %2 = vector.load %arg2[%c0_1, %c0_2] : memref<32x16xbf16, #tpu.memory_space<vmem>>, vector<32x16xbf16>
    %cst = arith.constant dense<0.000000e+00> : vector<8x16xf32>
    %3 = tpu.matmul %1, %2, %cst {dimension_numbers = #tpu.dot_dimension_numbers<[1], [0], [0], [1], [0, 0, 1, 1], [], []>} : vector<8x32xbf16>, vector<32x16xbf16>, vector<8x16xf32> -> vector<8x16xf32>
    %c0_3 = arith.constant 0 : index
    %c0_4 = arith.constant 0 : index
    %4 = vector.load %arg3[%c0_3, %c0_4] : memref<1x16xf32, #tpu.memory_space<vmem>>, vector<1x16xf32>
    %5 = vector.broadcast %4 : vector<1x16xf32> to vector<8x16xf32>
    %6 = arith.addf %3, %5 : vector<8x16xf32>
    %cst_5 = arith.constant 0.000000e+00 : f32
    %7 = vector.broadcast %cst_5 : f32 to vector<8x16xf32>
    %8 = arith.maximumf %6, %7 : vector<8x16xf32>
    %9 = arith.truncf %8 : vector<8x16xf32> to vector<8x16xbf16>
    %c0_6 = arith.constant 0 : index
    %c0_7 = arith.constant 0 : index
    %c0_8 = arith.constant 0 : index
    %10 = vector.load %arg4[%c0_6, %c0_7, %c0_8] : memref<2x16x16xbf16, #tpu.memory_space<vmem>>, vector<1x16x16xbf16>
    %11 = vector.shape_cast %10 : vector<1x16x16xbf16> to vector<16x16xbf16>
    %cst_9 = arith.constant dense<0.000000e+00> : vector<8x16xf32>
    %12 = tpu.matmul %9, %11, %cst_9 {dimension_numbers = #tpu.dot_dimension_numbers<[1], [0], [0], [1], [0, 0, 1, 1], [], []>} : vector<8x16xbf16>, vector<16x16xbf16>, vector<8x16xf32> -> vector<8x16xf32>
    %c0_10 = arith.constant 0 : index
    %c0_11 = arith.constant 0 : index
    %c0_12 = arith.constant 0 : index
    %13 = vector.load %arg5[%c0_10, %c0_11, %c0_12] : memref<2x1x16xf32, #tpu.memory_space<vmem>>, vector<1x1x16xf32>
    %14 = vector.shape_cast %13 : vector<1x1x16xf32> to vector<1x16xf32>
    %15 = vector.broadcast %14 : vector<1x16xf32> to vector<8x16xf32>
    %16 = arith.addf %12, %15 : vector<8x16xf32>
    %cst_13 = arith.constant 0.000000e+00 : f32
    %17 = vector.broadcast %cst_13 : f32 to vector<8x16xf32>
    %18 = arith.maximumf %16, %17 : vector<8x16xf32>
    %19 = arith.truncf %18 : vector<8x16xf32> to vector<8x16xbf16>
    %c1 = arith.constant 1 : index
    %c0_14 = arith.constant 0 : index
    %c0_15 = arith.constant 0 : index
    %20 = vector.load %arg4[%c1, %c0_14, %c0_15] : memref<2x16x16xbf16, #tpu.memory_space<vmem>>, vector<1x16x16xbf16>
    %21 = vector.shape_cast %20 : vector<1x16x16xbf16> to vector<16x16xbf16>
    %cst_16 = arith.constant dense<0.000000e+00> : vector<8x16xf32>
    %22 = tpu.matmul %19, %21, %cst_16 {dimension_numbers = #tpu.dot_dimension_numbers<[1], [0], [0], [1], [0, 0, 1, 1], [], []>} : vector<8x16xbf16>, vector<16x16xbf16>, vector<8x16xf32> -> vector<8x16xf32>
    %c1_17 = arith.constant 1 : index
    %c0_18 = arith.constant 0 : index
    %c0_19 = arith.constant 0 : index
    %23 = vector.load %arg5[%c1_17, %c0_18, %c0_19] : memref<2x1x16xf32, #tpu.memory_space<vmem>>, vector<1x1x16xf32>
    %24 = vector.shape_cast %23 : vector<1x1x16xf32> to vector<1x16xf32>
    %25 = vector.broadcast %24 : vector<1x16xf32> to vector<8x16xf32>
    %26 = arith.addf %22, %25 : vector<8x16xf32>
    %cst_20 = arith.constant 0.000000e+00 : f32
    %27 = vector.broadcast %cst_20 : f32 to vector<8x16xf32>
    %28 = arith.maximumf %26, %27 : vector<8x16xf32>
    %cst_21 = arith.constant dense<0.000000e+00> : vector<16xf32>
    %29 = vector.multi_reduction <add>, %28, %cst_21 [0] : vector<8x16xf32> to vector<16xf32>
    %30 = vector.shape_cast %29 : vector<16xf32> to vector<1x16xf32>
    %cst_22 = arith.constant 1.250000e-01 : f32
    %31 = vector.broadcast %cst_22 : f32 to vector<1x16xf32>
    %32 = arith.mulf %30, %31 : vector<1x16xf32>
    %33 = arith.truncf %32 : vector<1x16xf32> to vector<1x16xbf16>
    %c0_23 = arith.constant 0 : index
    %c0_24 = arith.constant 0 : index
    %34 = vector.load %arg6[%c0_23, %c0_24] : memref<16x16xbf16, #tpu.memory_space<vmem>>, vector<16x16xbf16>
    %cst_25 = arith.constant dense<0.000000e+00> : vector<1x16xf32>
    %35 = tpu.matmul %33, %34, %cst_25 {dimension_numbers = #tpu.dot_dimension_numbers<[1], [0], [0], [1], [0, 0, 1, 1], [], []>} : vector<1x16xbf16>, vector<16x16xbf16>, vector<1x16xf32> -> vector<1x16xf32>
    %c0_26 = arith.constant 0 : index
    %c0_27 = arith.constant 0 : index
    %36 = vector.load %arg7[%c0_26, %c0_27] : memref<1x16xf32, #tpu.memory_space<vmem>>, vector<1x16xf32>
    %37 = arith.addf %35, %36 : vector<1x16xf32>
    %cst_28 = arith.constant 0.000000e+00 : f32
    %38 = vector.broadcast %cst_28 : f32 to vector<1x16xf32>
    %39 = arith.maximumf %37, %38 : vector<1x16xf32>
    %c0_29 = arith.constant 0 : index
    %c0_30 = arith.constant 0 : index
    %40 = vector.load %arg1[%c0_29, %c0_30] : memref<1x16xf32, #tpu.memory_space<vmem>>, vector<1x16xf32>
    %41 = arith.truncf %40 : vector<1x16xf32> to vector<1x16xbf16>
    %42 = arith.truncf %39 : vector<1x16xf32> to vector<1x16xbf16>
    %c0_31 = arith.constant 0 : index
    %c0_32 = arith.constant 0 : index
    %43 = vector.load %arg8[%c0_31, %c0_32] : memref<16x128xbf16, #tpu.memory_space<vmem>>, vector<16x128xbf16>
    %cst_33 = arith.constant dense<0.000000e+00> : vector<1x128xf32>
    %44 = tpu.matmul %42, %43, %cst_33 {dimension_numbers = #tpu.dot_dimension_numbers<[1], [0], [0], [1], [0, 0, 1, 1], [], []>} : vector<1x16xbf16>, vector<16x128xbf16>, vector<1x128xf32> -> vector<1x128xf32>
    %c0_34 = arith.constant 0 : index
    %c0_35 = arith.constant 0 : index
    %45 = vector.load %arg9[%c0_34, %c0_35] : memref<16x128xbf16, #tpu.memory_space<vmem>>, vector<16x128xbf16>
    %cst_36 = arith.constant dense<0.000000e+00> : vector<1x128xf32>
    %46 = tpu.matmul %41, %45, %cst_36 {dimension_numbers = #tpu.dot_dimension_numbers<[1], [0], [0], [1], [0, 0, 1, 1], [], []>} : vector<1x16xbf16>, vector<16x128xbf16>, vector<1x128xf32> -> vector<1x128xf32>
    %47 = arith.addf %44, %46 : vector<1x128xf32>
    %c0_37 = arith.constant 0 : index
    %c0_38 = arith.constant 0 : index
    %48 = vector.load %arg10[%c0_37, %c0_38] : memref<1x128xf32, #tpu.memory_space<vmem>>, vector<1x128xf32>
    %49 = arith.addf %47, %48 : vector<1x128xf32>
    %cst_39 = arith.constant 0.000000e+00 : f32
    %50 = vector.broadcast %cst_39 : f32 to vector<1x128xf32>
    %51 = arith.maximumf %49, %50 : vector<1x128xf32>
    %52 = arith.truncf %51 : vector<1x128xf32> to vector<1x128xbf16>
    %c0_40 = arith.constant 0 : index
    %c0_41 = arith.constant 0 : index
    %c0_42 = arith.constant 0 : index
    %53 = vector.load %arg11[%c0_40, %c0_41, %c0_42] : memref<3x128x128xbf16, #tpu.memory_space<vmem>>, vector<1x128x128xbf16>
    %54 = vector.shape_cast %53 : vector<1x128x128xbf16> to vector<128x128xbf16>
    %cst_43 = arith.constant dense<0.000000e+00> : vector<1x128xf32>
    %55 = tpu.matmul %52, %54, %cst_43 {dimension_numbers = #tpu.dot_dimension_numbers<[1], [0], [0], [1], [0, 0, 1, 1], [], []>} : vector<1x128xbf16>, vector<128x128xbf16>, vector<1x128xf32> -> vector<1x128xf32>
    %c0_44 = arith.constant 0 : index
    %c0_45 = arith.constant 0 : index
    %c0_46 = arith.constant 0 : index
    %56 = vector.load %arg12[%c0_44, %c0_45, %c0_46] : memref<3x1x128xf32, #tpu.memory_space<vmem>>, vector<1x1x128xf32>
    %57 = vector.shape_cast %56 : vector<1x1x128xf32> to vector<1x128xf32>
    %58 = arith.addf %55, %57 : vector<1x128xf32>
    %cst_47 = arith.constant 0.000000e+00 : f32
    %59 = vector.broadcast %cst_47 : f32 to vector<1x128xf32>
    %60 = arith.maximumf %58, %59 : vector<1x128xf32>
    %61 = arith.truncf %60 : vector<1x128xf32> to vector<1x128xbf16>
    %c1_48 = arith.constant 1 : index
    %c0_49 = arith.constant 0 : index
    %c0_50 = arith.constant 0 : index
    %62 = vector.load %arg11[%c1_48, %c0_49, %c0_50] : memref<3x128x128xbf16, #tpu.memory_space<vmem>>, vector<1x128x128xbf16>
    %63 = vector.shape_cast %62 : vector<1x128x128xbf16> to vector<128x128xbf16>
    %cst_51 = arith.constant dense<0.000000e+00> : vector<1x128xf32>
    %64 = tpu.matmul %61, %63, %cst_51 {dimension_numbers = #tpu.dot_dimension_numbers<[1], [0], [0], [1], [0, 0, 1, 1], [], []>} : vector<1x128xbf16>, vector<128x128xbf16>, vector<1x128xf32> -> vector<1x128xf32>
    %c1_52 = arith.constant 1 : index
    %c0_53 = arith.constant 0 : index
    %c0_54 = arith.constant 0 : index
    %65 = vector.load %arg12[%c1_52, %c0_53, %c0_54] : memref<3x1x128xf32, #tpu.memory_space<vmem>>, vector<1x1x128xf32>
    %66 = vector.shape_cast %65 : vector<1x1x128xf32> to vector<1x128xf32>
    %67 = arith.addf %64, %66 : vector<1x128xf32>
    %cst_55 = arith.constant 0.000000e+00 : f32
    %68 = vector.broadcast %cst_55 : f32 to vector<1x128xf32>
    %69 = arith.maximumf %67, %68 : vector<1x128xf32>
    %70 = arith.truncf %69 : vector<1x128xf32> to vector<1x128xbf16>
    %c2 = arith.constant 2 : index
    %c0_56 = arith.constant 0 : index
    %c0_57 = arith.constant 0 : index
    %71 = vector.load %arg11[%c2, %c0_56, %c0_57] : memref<3x128x128xbf16, #tpu.memory_space<vmem>>, vector<1x128x128xbf16>
    %72 = vector.shape_cast %71 : vector<1x128x128xbf16> to vector<128x128xbf16>
    %cst_58 = arith.constant dense<0.000000e+00> : vector<1x128xf32>
    %73 = tpu.matmul %70, %72, %cst_58 {dimension_numbers = #tpu.dot_dimension_numbers<[1], [0], [0], [1], [0, 0, 1, 1], [], []>} : vector<1x128xbf16>, vector<128x128xbf16>, vector<1x128xf32> -> vector<1x128xf32>
    %c2_59 = arith.constant 2 : index
    %c0_60 = arith.constant 0 : index
    %c0_61 = arith.constant 0 : index
    %74 = vector.load %arg12[%c2_59, %c0_60, %c0_61] : memref<3x1x128xf32, #tpu.memory_space<vmem>>, vector<1x1x128xf32>
    %75 = vector.shape_cast %74 : vector<1x1x128xf32> to vector<1x128xf32>
    %76 = arith.addf %73, %75 : vector<1x128xf32>
    %c0_62 = arith.constant 0 : index
    %c0_63 = arith.constant 0 : index
    %77 = vector.load %arg13[%c0_62, %c0_63] : memref<1x128xf32, #tpu.memory_space<vmem>>, vector<1x128xf32>
    tpu.vector_store %arg13[%c0_62, %c0_63], %76 {strides = array<i32>} : memref<1x128xf32, #tpu.memory_space<vmem>>, vector<1x128xf32>,
    return
  }
}

</mosaic_0001>

<llo_original>
// kernel: film_ar_layer_forward.1
$region0: #{film_ar_layer_forward.1}
  #allocation0 [shape = 'u32[]', space=smem, size = 0x4, offset = 0x4, fixed_abs, tag = 'smem constant byte address 0x4 - core index']
  #allocation1 [shape = 'u32[144,128]{1,0:T(1,128)}', space=vmem, size = 0x12000, scoped, tag = 'internal scratch']
  %s0 = inlined_call_operand.vmem [shape: f32[8,32], index: 0, kind: input, shape index: {}]
  %s1 = inlined_call_operand.hbm [shape: f32[1,16], index: 1, kind: input, shape index: {}]
  %s2 = inlined_call_operand.vmem [shape: bf16[32,16], index: 2, kind: input, shape index: {}]
  %s3 = inlined_call_operand.vmem [shape: f32[1,16], index: 3, kind: input, shape index: {}]
  %s4 = inlined_call_operand.vmem [shape: bf16[2,16,16], index: 4, kind: input, shape index: {}]
  %s5 = inlined_call_operand.vmem [shape: f32[2,1,16], index: 5, kind: input, shape index: {}]
  %s6 = inlined_call_operand.vmem [shape: bf16[16,16], index: 6, kind: input, shape index: {}]
  %s7 = inlined_call_operand.vmem [shape: f32[1,16], index: 7, kind: input, shape index: {}]
  %s8 = inlined_call_operand.hbm [shape: bf16[16,128], index: 8, kind: input, shape index: {}]
  %s9 = inlined_call_operand.hbm [shape: bf16[16,128], index: 9, kind: input, shape index: {}]
  %s10 = inlined_call_operand.vmem [shape: f32[1,128], index: 10, kind: input, shape index: {}]
  %s11 = inlined_call_operand.hbm [shape: bf16[3,128,128], index: 11, kind: input, shape index: {}]
  %s12 = inlined_call_operand.hbm [shape: f32[3,1,128], index: 12, kind: input, shape index: {}]
  %s13 = inlined_call_operand.vmem [shape: f32[1,128], index: 13, kind: output, shape index: {}]
  %s14 = sld [smem:[#allocation0]]
  $region82: #{film_ar_layer_forward.1} parent=0
    _
  %s16 = ssub.s32 1, %s14
  %s17 = scalar_select 0, %s16, %s14
  $region1: #{film_ar_layer_forward.1} parent=0
    #allocation2 [shape = 'u8[512]{0}', space=vmem, size = 0x400, scoped, tag = 'input window, operand 1, single buffered']
    #allocation3 [shape = 's32[1]{0}', space=sflag, size = 0x4, scoped, tag = 'scoped memory for film_ar_layer_forward.1']
    #allocation4 [shape = 'u8[4096]{0}', space=vmem, size = 0x1000, scoped, tag = 'input window, operand 8, single buffered']
    #allocation5 [shape = 's32[1]{0}', space=sflag, size = 0x4, scoped, tag = 'scoped memory for film_ar_layer_forward.1']
    #allocation6 [shape = 'u8[4096]{0}', space=vmem, size = 0x1000, scoped, tag = 'input window, operand 9, single buffered']
    #allocation7 [shape = 'u8[98304]{0}', space=vmem, size = 0x18000, scoped, tag = 'input window, operand 11, single buffered']
    #allocation8 [shape = 's32[1]{0}', space=sflag, size = 0x4, scoped, tag = 'scoped memory for film_ar_layer_forward.1']
    #allocation9 [shape = 'u8[1536]{0}', space=vmem, size = 0x800, scoped, tag = 'input window, operand 12, single buffered']
    %18 = vsyncpa [#allocation3], 0
    %19 = vsyncpa [#allocation5], 0
    %20 = vsyncpa [#allocation8], 0
    // Predicated region
    $region2: #{film_ar_layer_forward.1} parent=1 // pred_check
      _
    $region3: #{film_ar_layer_forward.1} parent=1 // pred_check_branch
      %22 = sbr.rel (0) target = $region5
    $region4: #{film_ar_layer_forward.1} parent=1 // pred_region
      _
    $region5: #{film_ar_layer_forward.1} parent=1 // pred_fallthru
      _
    // Predicated region
    $region6: #{film_ar_layer_forward.1} parent=1 // pred_check
      _
    $region7: #{film_ar_layer_forward.1} parent=1 // pred_check_branch
      %24 = sbr.rel (0) target = $region9
    $region8: #{film_ar_layer_forward.1} parent=1 // pred_region
      %s26 = ssub.s32 16, 16
      %27 = vsyncadd [#allocation3], %s26
      %s29 = sshll.u32 [#allocation2], 4
      %s30 = int_to_ptr.vmem [resolvable:$true] %s29
      %32 = dma.hbm_to_vmem [thread:$0]  %s1, 16, %s30, [#allocation3]
    $region9: #{film_ar_layer_forward.1} parent=1 // pred_fallthru
      _
    // Predicated region
    $region10: #{film_ar_layer_forward.1} parent=1 // pred_check
      _
    $region11: #{film_ar_layer_forward.1} parent=1 // pred_check_branch
      %34 = sbr.rel (0) target = $region13
    $region12: #{film_ar_layer_forward.1} parent=1 // pred_region
      _
    $region13: #{film_ar_layer_forward.1} parent=1 // pred_fallthru
      _
    // Predicated region
    $region14: #{film_ar_layer_forward.1} parent=1 // pred_check
      _
    $region15: #{film_ar_layer_forward.1} parent=1 // pred_check_branch
      %36 = sbr.rel (0) target = $region17
    $region16: #{film_ar_layer_forward.1} parent=1 // pred_region
      _
    $region17: #{film_ar_layer_forward.1} parent=1 // pred_fallthru
      _
    // Predicated region
    $region18: #{film_ar_layer_forward.1} parent=1 // pred_check
      _
    $region19: #{film_ar_layer_forward.1} parent=1 // pred_check_branch
      %38 = sbr.rel (0) target = $region21
    $region20: #{film_ar_layer_forward.1} parent=1 // pred_region
      _
    $region21: #{film_ar_layer_forward.1} parent=1 // pred_fallthru
      _
    // Predicated region
    $region22: #{film_ar_layer_forward.1} parent=1 // pred_check
      _
    $region23: #{film_ar_layer_forward.1} parent=1 // pred_check_branch
      %40 = sbr.rel (0) target = $region25
    $region24: #{film_ar_layer_forward.1} parent=1 // pred_region
      _
    $region25: #{film_ar_layer_forward.1} parent=1 // pred_fallthru
      _
    // Predicated region
    $region26: #{film_ar_layer_forward.1} parent=1 // pred_check
      _
    $region27: #{film_ar_layer_forward.1} parent=1 // pred_check_branch
      %42 = sbr.rel (0) target = $region29
    $region28: #{film_ar_layer_forward.1} parent=1 // pred_region
      _
    $region29: #{film_ar_layer_forward.1} parent=1 // pred_fallthru
      _
    // Predicated region
    $region30: #{film_ar_layer_forward.1} parent=1 // pred_check
      _
    $region31: #{film_ar_layer_forward.1} parent=1 // pred_check_branch
      %44 = sbr.rel (0) target = $region33
    $region32: #{film_ar_layer_forward.1} parent=1 // pred_region
      _
    $region33: #{film_ar_layer_forward.1} parent=1 // pred_fallthru
      _
    // Predicated region
    $region34: #{film_ar_layer_forward.1} parent=1 // pred_check
      _
    $region35: #{film_ar_layer_forward.1} parent=1 // pred_check_branch
      %46 = sbr.rel (0) target = $region37
    $region36: #{film_ar_layer_forward.1} parent=1 // pred_region
      %s48 = ssub.s32 128, 128
      %49 = vsyncadd [#allocation5], %s48
      %s50 = sshll.u32 [#allocation4], 4
      %s51 = int_to_ptr.vmem [resolvable:$true] %s50
      %56 = dma.hbm_to_vmem [thread:$0]  %s8, 128, %s51, [#allocation5], 64, 64, 4
    $region37: #{film_ar_layer_forward.1} parent=1 // pred_fallthru
      _
    // Predicated region
    $region38: #{film_ar_layer_forward.1} parent=1 // pred_check
      _
    $region39: #{film_ar_layer_forward.1} parent=1 // pred_check_branch
      %58 = sbr.rel (0) target = $region41
    $region40: #{film_ar_layer_forward.1} parent=1 // pred_region
      %s60 = ssub.s32 128, 128
      %61 = vsyncadd [#allocation5], %s60
      %s62 = sshll.u32 [#allocation6], 4
      %s63 = int_to_ptr.vmem [resolvable:$true] %s62
      %68 = dma.hbm_to_vmem [thread:$0]  %s9, 128, %s63, [#allocation5], 64, 64, 4
    $region41: #{film_ar_layer_forward.1} parent=1 // pred_fallthru
      _
    // Predicated region
    $region42: #{film_ar_layer_forward.1} parent=1 // pred_check
      _
    $region43: #{film_ar_layer_forward.1} parent=1 // pred_check_branch
      %70 = sbr.rel (0) target = $region45
    $region44: #{film_ar_layer_forward.1} parent=1 // pred_region
      _
    $region45: #{film_ar_layer_forward.1} parent=1 // pred_fallthru
      _
    // Predicated region
    $region46: #{film_ar_layer_forward.1} parent=1 // pred_check
      _
    $region47: #{film_ar_layer_forward.1} parent=1 // pred_check_branch
      %72 = sbr.rel (0) target = $region49
    $region48: #{film_ar_layer_forward.1} parent=1 // pred_region
      %s74 = ssub.s32 3072, 3072
      %75 = vsyncadd [#allocation8], %s74
      %s76 = sshll.u32 [#allocation7], 4
      %s77 = int_to_ptr.vmem [resolvable:$true] %s76
      %82 = dma.hbm_to_vmem [thread:$0]  %s11, 3072, %s77, [#allocation8], 64, 64, 4
    $region49: #{film_ar_layer_forward.1} parent=1 // pred_fallthru
      _
    // Predicated region
    $region50: #{film_ar_layer_forward.1} parent=1 // pred_check
      _
    $region51: #{film_ar_layer_forward.1} parent=1 // pred_check_branch
      %84 = sbr.rel (0) target = $region53
    $region52: #{film_ar_layer_forward.1} parent=1 // pred_region
      %s86 = ssub.s32 48, 48
      %87 = vsyncadd [#allocation8], %s86
      %s88 = sshll.u32 [#allocation9], 4
      %s89 = int_to_ptr.vmem [resolvable:$true] %s88
      %94 = dma.hbm_to_vmem [thread:$0]  %s12, 48, %s89, [#allocation8], 16, 16, 1
    $region53: #{film_ar_layer_forward.1} parent=1 // pred_fallthru
      _
    // Predicated region
    $region54: #{film_ar_layer_forward.1} parent=1 // pred_check
      _
    $region55: #{film_ar_layer_forward.1} parent=1 // pred_check_branch
      %96 = sbr.rel (0) target = $region57
    $region56: #{film_ar_layer_forward.1} parent=1 // pred_region
      %97 = dma.done [#allocation3], 16
    $region57: #{film_ar_layer_forward.1} parent=1 // pred_fallthru
      _
    // Predicated region
    $region58: #{film_ar_layer_forward.1} parent=1 // pred_check
      _
    $region59: #{film_ar_layer_forward.1} parent=1 // pred_check_branch
      %99 = sbr.rel (0) target = $region61
    $region60: #{film_ar_layer_forward.1} parent=1 // pred_region
      %100 = dma.done [#allocation5], 128
    $region61: #{film_ar_layer_forward.1} parent=1 // pred_fallthru
      _
    // Predicated region
    $region62: #{film_ar_layer_forward.1} parent=1 // pred_check
      _
    $region63: #{film_ar_layer_forward.1} parent=1 // pred_check_branch
      %102 = sbr.rel (0) target = $region65
    $region64: #{film_ar_layer_forward.1} parent=1 // pred_region
      %103 = dma.done [#allocation5], 128
    $region65: #{film_ar_layer_forward.1} parent=1 // pred_fallthru
      _
    // Predicated region
    $region66: #{film_ar_layer_forward.1} parent=1 // pred_check
      _
    $region67: #{film_ar_layer_forward.1} parent=1 // pred_check_branch
      %105 = sbr.rel (0) target = $region69
    $region68: #{film_ar_layer_forward.1} parent=1 // pred_region
      %106 = dma.done [#allocation8], 3072
    $region69: #{film_ar_layer_forward.1} parent=1 // pred_fallthru
      _
    // Predicated region
    $region70: #{film_ar_layer_forward.1} parent=1 // pred_check
      _
    $region71: #{film_ar_layer_forward.1} parent=1 // pred_check_branch
      %108 = sbr.rel (0) target = $region73
    $region72: #{film_ar_layer_forward.1} parent=1 // pred_region
      %109 = dma.done [#allocation8], 48
    $region73: #{film_ar_layer_forward.1} parent=1 // pred_fallthru
      _
    %v111 = vld [vmem:[%s0] sm:$0xff]
    %v112 = vpack.c.bf16 %v111, %v111
    %v113 = vld [vmem:[%s2] sm:$0xf]
    %v114 = vld [vmem:[%s2 + $0x4] sm:$0xf]
    %v115 = vld [vmem:[%s2 + $0x8] sm:$0xf]
    %v116 = vld [vmem:[%s2 + $0xc] sm:$0xf]
    %v117 = vld [vmem:[%s3] sm:$0x1]
    %v119 = vlaneseq
    %v120 = vshrl.u32 %v119, 7
    %v121 = vsub.s32 0, %v120
    %v122 = vrot.slane %v117, %v121
    %v128 = vunpack.c.l.b16 %v113
    %v129 = vunpack.c.l.b16 %v114
    %v130 = vunpack.c.l.b16 %v115
    %v131 = vunpack.c.l.b16 %v116
    %v132 = vpack.c.b16 %v129, %v128
    %v133 = vpack.c.b16 %v131, %v130
    %vm136 = vcmask 261120
    %v138 = vsel %vm136, %v112, 0
    %140 = vmatprep.subr.bf16.mxu0 0
    %141 = vmatpush1.bf16.msra.mxu0 %v132
    %142 = vmatprep.subr.bf16.mxu0 0
    %143 = vmatpush1.bf16.msra.mxu0 %v133
    %144 = vmatprep.subr.bf16.mxu0 0
    %145 = vmatpush1.bf16.msra.mxu0 0
    %146 = vmatprep.subr.bf16.mxu0 0
    %147 = vmatpush1.bf16.msra.mxu0 0
    %148 = vmatprep.subr.bf16.mxu0 0
    %149 = vmatpush1.bf16.msra.mxu0 0
    %150 = vmatprep.subr.bf16.mxu0 0
    %151 = vmatpush1.bf16.msra.mxu0 0
    %152 = vmatprep.subr.bf16.mxu0 0
    %153 = vmatpush1.bf16.msra.mxu0 0
    %154 = vmatprep.subr.bf16.mxu0 0
    %155 = vmatpush1.bf16.msra.mxu0 0
    %156 = vmatprep.subr.bf16.mxu0 0
    %157 = vmatpush1.bf16.msra.mxu0 0
    %158 = vmatprep.subr.bf16.mxu0 0
    %159 = vmatpush1.bf16.msra.mxu0 0
    %160 = vmatprep.subr.bf16.mxu0 0
    %161 = vmatpush1.bf16.msra.mxu0 0
    %162 = vmatprep.subr.bf16.mxu0 0
    %163 = vmatpush1.bf16.msra.mxu0 0
    %164 = vmatprep.subr.bf16.mxu0 0
    %165 = vmatpush1.bf16.msra.mxu0 0
    %166 = vmatprep.subr.bf16.mxu0 0
    %167 = vmatpush1.bf16.msra.mxu0 0
    %168 = vmatprep.subr.bf16.mxu0 0
    %169 = vmatpush1.bf16.msra.mxu0 0
    %170 = vmatprep.subr.bf16.mxu0 0
    %171 = vmatpush1.bf16.msra.mxu0 0
    %172 = vmatprep.mubr.bf16.mxu0 0
    %173 = vmatmul.mubr.bf16.gmra.mrb[0].mxu0 %v138
    %v174 = vpop.f32.mrb[0].mxu0
    %v175 = vadd.f32 %v122, %v174
    %v176 = vpop.f32.mrb[0].mxu0
    %v177 = vpop.f32.mrb[0].mxu0
    %v178 = vpop.f32.mrb[0].mxu0
    %179 = vdwg.mxu0
    %v180 = vmax.f32 %v175, 0.0
    %v181 = vpack.c.bf16 %v180, %v180
    %v182 = vld [vmem:[%s4] sm:$0xf]
    %v183 = vld [vmem:[%s4 + $0x4] sm:$0xf]
    %v184 = vld [vmem:[%s5] sm:$0x1]
    %v186 = vlaneseq
    %v187 = vshrl.u32 %v186, 7
    %v188 = vsub.s32 0, %v187
    %v189 = vrot.slane %v184, %v188
    %v193 = vunpack.c.l.b16 %v182
    %v194 = vunpack.c.l.b16 %v183
    %v195 = vpack.c.b16 %v194, %v193
    %vm197 = vcmask 130048
    %v199 = vsel %vm197, %v181, 0
    %201 = vmatprep.subr.bf16.mxu0 0
    %202 = vmatpush1.bf16.msra.mxu0 %v195
    %203 = vmatprep.subr.bf16.mxu0 0
    %204 = vmatpush1.bf16.msra.mxu0 0
    %205 = vmatprep.subr.bf16.mxu0 0
    %206 = vmatpush1.bf16.msra.mxu0 0
    %207 = vmatprep.subr.bf16.mxu0 0
    %208 = vmatpush1.bf16.msra.mxu0 0
    %209 = vmatprep.subr.bf16.mxu0 0
    %210 = vmatpush1.bf16.msra.mxu0 0
    %211 = vmatprep.subr.bf16.mxu0 0
    %212 = vmatpush1.bf16.msra.mxu0 0
    %213 = vmatprep.subr.bf16.mxu0 0
    %214 = vmatpush1.bf16.msra.mxu0 0
    %215 = vmatprep.subr.bf16.mxu0 0
    %216 = vmatpush1.bf16.msra.mxu0 0
    %217 = vmatprep.subr.bf16.mxu0 0
    %218 = vmatpush1.bf16.msra.mxu0 0
    %219 = vmatprep.subr.bf16.mxu0 0
    %220 = vmatpush1.bf16.msra.mxu0 0
    %221 = vmatprep.subr.bf16.mxu0 0
    %222 = vmatpush1.bf16.msra.mxu0 0
    %223 = vmatprep.subr.bf16.mxu0 0
    %224 = vmatpush1.bf16.msra.mxu0 0
    %225 = vmatprep.subr.bf16.mxu0 0
    %226 = vmatpush1.bf16.msra.mxu0 0
    %227 = vmatprep.subr.bf16.mxu0 0
    %228 = vmatpush1.bf16.msra.mxu0 0
    %229 = vmatprep.subr.bf16.mxu0 0
    %230 = vmatpush1.bf16.msra.mxu0 0
    %231 = vmatprep.subr.bf16.mxu0 0
    %232 = vmatpush1.bf16.msra.mxu0 0
    %233 = vmatprep.mubr.bf16.mxu0 0
    %234 = vmatmul.mubr.bf16.gmra.mrb[0].mxu0 %v199
    %v235 = vpop.f32.mrb[0].mxu0
    %v236 = vadd.f32 %v189, %v235
    %v237 = vpop.f32.mrb[0].mxu0
    %v238 = vpop.f32.mrb[0].mxu0
    %v239 = vpop.f32.mrb[0].mxu0
    %240 = vdwg.mxu0
    %v241 = vmax.f32 %v236, 0.0
    %v242 = vpack.c.bf16 %v241, %v241
    %s243 = scalar_lea.vmem %s4, 8
    %v244 = vld [vmem:[%s243] sm:$0xf]
    %v245 = vld [vmem:[%s243 + $0x4] sm:$0xf]
    %s246 = scalar_lea.vmem %s5, 1
    %v247 = vld [vmem:[%s246] sm:$0x1]
    %v249 = vlaneseq
    %v250 = vshrl.u32 %v249, 7
    %v251 = vsub.s32 0, %v250
    %v252 = vrot.slane %v247, %v251
    %v256 = vunpack.c.l.b16 %v244
    %v257 = vunpack.c.l.b16 %v245
    %v258 = vpack.c.b16 %v257, %v256
    %v261 = vsel %vm197, %v242, 0
    %263 = vmatprep.subr.bf16.mxu0 0
    %264 = vmatpush1.bf16.msra.mxu0 %v258
    %265 = vmatprep.subr.bf16.mxu0 0
    %266 = vmatpush1.bf16.msra.mxu0 0
    %267 = vmatprep.subr.bf16.mxu0 0
    %268 = vmatpush1.bf16.msra.mxu0 0
    %269 = vmatprep.subr.bf16.mxu0 0
    %270 = vmatpush1.bf16.msra.mxu0 0
    %271 = vmatprep.subr.bf16.mxu0 0
    %272 = vmatpush1.bf16.msra.mxu0 0
    %273 = vmatprep.subr.bf16.mxu0 0
    %274 = vmatpush1.bf16.msra.mxu0 0
    %275 = vmatprep.subr.bf16.mxu0 0
    %276 = vmatpush1.bf16.msra.mxu0 0
    %277 = vmatprep.subr.bf16.mxu0 0
    %278 = vmatpush1.bf16.msra.mxu0 0
    %279 = vmatprep.subr.bf16.mxu0 0
    %280 = vmatpush1.bf16.msra.mxu0 0
    %281 = vmatprep.subr.bf16.mxu0 0
    %282 = vmatpush1.bf16.msra.mxu0 0
    %283 = vmatprep.subr.bf16.mxu0 0
    %284 = vmatpush1.bf16.msra.mxu0 0
    %285 = vmatprep.subr.bf16.mxu0 0
    %286 = vmatpush1.bf16.msra.mxu0 0
    %287 = vmatprep.subr.bf16.mxu0 0
    %288 = vmatpush1.bf16.msra.mxu0 0
    %289 = vmatprep.subr.bf16.mxu0 0
    %290 = vmatpush1.bf16.msra.mxu0 0
    %291 = vmatprep.subr.bf16.mxu0 0
    %292 = vmatpush1.bf16.msra.mxu0 0
    %293 = vmatprep.subr.bf16.mxu0 0
    %294 = vmatpush1.bf16.msra.mxu0 0
    %295 = vmatprep.mubr.bf16.mxu0 0
    %296 = vmatmul.mubr.bf16.gmra.mrb[0].mxu0 %v261
    %v297 = vpop.f32.mrb[0].mxu0
    %v298 = vadd.f32 %v252, %v297
    %v299 = vpop.f32.mrb[0].mxu0
    %v300 = vpop.f32.mrb[0].mxu0
    %v301 = vpop.f32.mrb[0].mxu0
    %302 = vdwg.mxu0
    %v303 = vmax.f32 %v298, 0.0
    %v304 = vsel %vm197, %v303, 0.0
    %v305 = vrot.slane %v304, 4
    %v306 = vadd.f32 %v304, %v305
    %v307 = vrot.slane %v306, 2
    %v308 = vadd.f32 %v306, %v307
    %v309 = vrot.slane %v308, 1
    %v310 = vadd.f32 %v308, %v309
    %v311 = vmul.f32 %v310, 0.125
    %v312 = vpack.c.bf16 %v311, %v311
    %v313 = vld [vmem:[%s6] sm:$0xf]
    %v314 = vld [vmem:[%s6 + $0x4] sm:$0xf]
    %v315 = vld [vmem:[%s7] sm:$0x1]
    %v318 = vunpack.c.l.b16 %v313
    %v319 = vunpack.c.l.b16 %v314
    %v320 = vpack.c.b16 %v319, %v318
    %v323 = vsel %vm197, %v312, 0
    %325 = vmatprep.subr.bf16.mxu0 0
    %326 = vmatpush1.bf16.msra.mxu0 %v320
    %327 = vmatprep.subr.bf16.mxu0 0
    %328 = vmatpush1.bf16.msra.mxu0 0
    %329 = vmatprep.subr.bf16.mxu0 0
    %330 = vmatpush1.bf16.msra.mxu0 0
    %331 = vmatprep.subr.bf16.mxu0 0
    %332 = vmatpush1.bf16.msra.mxu0 0
    %333 = vmatprep.subr.bf16.mxu0 0
    %334 = vmatpush1.bf16.msra.mxu0 0
    %335 = vmatprep.subr.bf16.mxu0 0
    %336 = vmatpush1.bf16.msra.mxu0 0
    %337 = vmatprep.subr.bf16.mxu0 0
    %338 = vmatpush1.bf16.msra.mxu0 0
    %339 = vmatprep.subr.bf16.mxu0 0
    %340 = vmatpush1.bf16.msra.mxu0 0
    %341 = vmatprep.subr.bf16.mxu0 0
    %342 = vmatpush1.bf16.msra.mxu0 0
    %343 = vmatprep.subr.bf16.mxu0 0
    %344 = vmatpush1.bf16.msra.mxu0 0
    %345 = vmatprep.subr.bf16.mxu0 0
    %346 = vmatpush1.bf16.msra.mxu0 0
    %347 = vmatprep.subr.bf16.mxu0 0
    %348 = vmatpush1.bf16.msra.mxu0 0
    %349 = vmatprep.subr.bf16.mxu0 0
    %350 = vmatpush1.bf16.msra.mxu0 0
    %351 = vmatprep.subr.bf16.mxu0 0
    %352 = vmatpush1.bf16.msra.mxu0 0
    %353 = vmatprep.subr.bf16.mxu0 0
    %354 = vmatpush1.bf16.msra.mxu0 0
    %355 = vmatprep.subr.bf16.mxu0 0
    %356 = vmatpush1.bf16.msra.mxu0 0
    %357 = vmatprep.mubr.bf16.mxu0 0
    %358 = vmatmul.mubr.bf16.gmra.mrb[0].mxu0 %v323
    %v359 = vpop.f32.mrb[0].mxu0
    %v360 = vadd.f32 %v315, %v359
    %v361 = vpop.f32.mrb[0].mxu0
    %v362 = vpop.f32.mrb[0].mxu0
    %v363 = vpop.f32.mrb[0].mxu0
    %364 = vdwg.mxu0
    %v365 = vmax.f32 %v360, 0.0
    %v366 = vld [vmem:[#allocation2] sm:$0x1]
    %v367 = vpack.c.bf16 %v366, %v366
    %v368 = vpack.c.bf16 %v365, %v365
    %v369 = vld [vmem:[#allocation4] sm:$0xf]
    %v370 = vld [vmem:[#allocation4 + $0x4] sm:$0xf]
    %v371 = vld [vmem:[#allocation6] sm:$0xf]
    %v372 = vld [vmem:[#allocation6 + $0x4] sm:$0xf]
    %v375 = vunpack.c.l.b16 %v371
    %v376 = vunpack.c.l.b16 %v372
    %v377 = vpack.c.b16 %v376, %v375
    %v380 = vsel %vm197, %v367, 0
    %382 = vmatprep.subr.bf16.mxu0 0
    %383 = vmatpush1.bf16.msra.mxu0 %v377
    %384 = vmatprep.subr.bf16.mxu0 0
    %385 = vmatpush1.bf16.msra.mxu0 0
    %386 = vmatprep.subr.bf16.mxu0 0
    %387 = vmatpush1.bf16.msra.mxu0 0
    %388 = vmatprep.subr.bf16.mxu0 0
    %389 = vmatpush1.bf16.msra.mxu0 0
    %390 = vmatprep.subr.bf16.mxu0 0
    %391 = vmatpush1.bf16.msra.mxu0 0
    %392 = vmatprep.subr.bf16.mxu0 0
    %393 = vmatpush1.bf16.msra.mxu0 0
    %394 = vmatprep.subr.bf16.mxu0 0
    %395 = vmatpush1.bf16.msra.mxu0 0
    %396 = vmatprep.subr.bf16.mxu0 0
    %397 = vmatpush1.bf16.msra.mxu0 0
    %398 = vmatprep.subr.bf16.mxu0 0
    %399 = vmatpush1.bf16.msra.mxu0 0
    %400 = vmatprep.subr.bf16.mxu0 0
    %401 = vmatpush1.bf16.msra.mxu0 0
    %402 = vmatprep.subr.bf16.mxu0 0
    %403 = vmatpush1.bf16.msra.mxu0 0
    %404 = vmatprep.subr.bf16.mxu0 0
    %405 = vmatpush1.bf16.msra.mxu0 0
    %406 = vmatprep.subr.bf16.mxu0 0
    %407 = vmatpush1.bf16.msra.mxu0 0
    %408 = vmatprep.subr.bf16.mxu0 0
    %409 = vmatpush1.bf16.msra.mxu0 0
    %410 = vmatprep.subr.bf16.mxu0 0
    %411 = vmatpush1.bf16.msra.mxu0 0
    %412 = vmatprep.subr.bf16.mxu0 0
    %413 = vmatpush1.bf16.msra.mxu0 0
    %414 = vmatprep.mubr.bf16.mxu0 0
    %415 = vmatmul.mubr.bf16.gmra.mrb[0].mxu0 %v380
    %v416 = vpop.f32.mrb[0].mxu0
    %v417 = vadd.f32 0.0, %v416
    %v418 = vpop.f32.mrb[0].mxu0
    %v419 = vpop.f32.mrb[0].mxu0
    %v420 = vpop.f32.mrb[0].mxu0
    %421 = vdwg.mxu0
    %v424 = vunpack.c.l.b16 %v369
    %v425 = vunpack.c.l.b16 %v370
    %v426 = vpack.c.b16 %v425, %v424
    %v429 = vsel %vm197, %v368, 0
    %431 = vmatprep.subr.bf16.mxu0 0
    %432 = vmatpush1.bf16.msra.mxu0 %v426
    %433 = vmatprep.subr.bf16.mxu0 0
    %434 = vmatpush1.bf16.msra.mxu0 0
    %435 = vmatprep.subr.bf16.mxu0 0
    %436 = vmatpush1.bf16.msra.mxu0 0
    %437 = vmatprep.subr.bf16.mxu0 0
    %438 = vmatpush1.bf16.msra.mxu0 0
    %439 = vmatprep.subr.bf16.mxu0 0
    %440 = vmatpush1.bf16.msra.mxu0 0
    %441 = vmatprep.subr.bf16.mxu0 0
    %442 = vmatpush1.bf16.msra.mxu0 0
    %443 = vmatprep.subr.bf16.mxu0 0
    %444 = vmatpush1.bf16.msra.mxu0 0
    %445 = vmatprep.subr.bf16.mxu0 0
    %446 = vmatpush1.bf16.msra.mxu0 0
    %447 = vmatprep.subr.bf16.mxu0 0
    %448 = vmatpush1.bf16.msra.mxu0 0
    %449 = vmatprep.subr.bf16.mxu0 0
    %450 = vmatpush1.bf16.msra.mxu0 0
    %451 = vmatprep.subr.bf16.mxu0 0
    %452 = vmatpush1.bf16.msra.mxu0 0
    %453 = vmatprep.subr.bf16.mxu0 0
    %454 = vmatpush1.bf16.msra.mxu0 0
    %455 = vmatprep.subr.bf16.mxu0 0
    %456 = vmatpush1.bf16.msra.mxu0 0
    %457 = vmatprep.subr.bf16.mxu0 0
    %458 = vmatpush1.bf16.msra.mxu0 0
    %459 = vmatprep.subr.bf16.mxu0 0
    %460 = vmatpush1.bf16.msra.mxu0 0
    %461 = vmatprep.subr.bf16.mxu0 0
    %462 = vmatpush1.bf16.msra.mxu0 0
    %463 = vmatprep.mubr.bf16.mxu0 0
    %464 = vmatmul.mubr.bf16.gmra.mrb[0].mxu0 %v429
    %v465 = vpop.f32.mrb[0].mxu0
    %v466 = vadd.f32 %v417, %v465
    %v467 = vpop.f32.mrb[0].mxu0
    %v468 = vpop.f32.mrb[0].mxu0
    %v469 = vpop.f32.mrb[0].mxu0
    %470 = vdwg.mxu0
    %v471 = vld [vmem:[%s10] sm:$0x1]
    %v472 = vadd.f32 %v466, %v471
    %v473 = vmax.f32 %v472, 0.0
    %v474 = vpack.c.bf16 %v473, %v473
    %v475 = vld [vmem:[#allocation7] sm:$0xf]
    %v476 = vld [vmem:[#allocation7 + $0x4] sm:$0xf]
    %v477 = vld [vmem:[#allocation7 + $0x8] sm:$0xf]
    %v478 = vld [vmem:[#allocation7 + $0xc] sm:$0xf]
    %v479 = vld [vmem:[#allocation7 + $0x10] sm:$0xf]
    %v480 = vld [vmem:[#allocation7 + $0x14] sm:$0xf]
    %v481 = vld [vmem:[#allocation7 + $0x18] sm:$0xf]
    %v482 = vld [vmem:[#allocation7 + $0x1c] sm:$0xf]
    %v483 = vld [vmem:[#allocation7 + $0x20] sm:$0xf]
    %v484 = vld [vmem:[#allocation7 + $0x24] sm:$0xf]
    %v485 = vld [vmem:[#allocation7 + $0x28] sm:$0xf]
    %v486 = vld [vmem:[#allocation7 + $0x2c] sm:$0xf]
    %v487 = vld [vmem:[#allocation7 + $0x30] sm:$0xf]
    %v488 = vld [vmem:[#allocation7 + $0x34] sm:$0xf]
    %v489 = vld [vmem:[#allocation7 + $0x38] sm:$0xf]
    %v490 = vld [vmem:[#allocation7 + $0x3c] sm:$0xf]
    %v491 = vld [vmem:[#allocation9] sm:$0x1]
    %v508 = vunpack.c.l.b16 %v475
    %v509 = vunpack.c.l.b16 %v476
    %v510 = vunpack.c.l.b16 %v477
    %v511 = vunpack.c.l.b16 %v478
    %v512 = vunpack.c.l.b16 %v479
    %v513 = vunpack.c.l.b16 %v480
    %v514 = vunpack.c.l.b16 %v481
    %v515 = vunpack.c.l.b16 %v482
    %v516 = vunpack.c.l.b16 %v483
    %v517 = vunpack.c.l.b16 %v484
    %v518 = vunpack.c.l.b16 %v485
    %v519 = vunpack.c.l.b16 %v486
    %v520 = vunpack.c.l.b16 %v487
    %v521 = vunpack.c.l.b16 %v488
    %v522 = vunpack.c.l.b16 %v489
    %v523 = vunpack.c.l.b16 %v490
    %v524 = vpack.c.b16 %v509, %v508
    %v525 = vpack.c.b16 %v511, %v510
    %v526 = vpack.c.b16 %v513, %v512
    %v527 = vpack.c.b16 %v515, %v514
    %v528 = vpack.c.b16 %v517, %v516
    %v529 = vpack.c.b16 %v519, %v518
    %v530 = vpack.c.b16 %v521, %v520
    %v531 = vpack.c.b16 %v523, %v522
    %540 = vmatprep.subr.bf16.mxu0 0
    %541 = vmatpush1.bf16.msra.mxu0 %v524
    %542 = vmatprep.subr.bf16.mxu0 0
    %543 = vmatpush1.bf16.msra.mxu0 %v525
    %544 = vmatprep.subr.bf16.mxu0 0
    %545 = vmatpush1.bf16.msra.mxu0 %v526
    %546 = vmatprep.subr.bf16.mxu0 0
    %547 = vmatpush1.bf16.msra.mxu0 %v527
    %548 = vmatprep.subr.bf16.mxu0 0
    %549 = vmatpush1.bf16.msra.mxu0 %v528
    %550 = vmatprep.subr.bf16.mxu0 0
    %551 = vmatpush1.bf16.msra.mxu0 %v529
    %552 = vmatprep.subr.bf16.mxu0 0
    %553 = vmatpush1.bf16.msra.mxu0 %v530
    %554 = vmatprep.subr.bf16.mxu0 0
    %555 = vmatpush1.bf16.msra.mxu0 %v531
    %556 = vmatprep.subr.bf16.mxu0 0
    %557 = vmatpush1.bf16.msra.mxu0 0
    %558 = vmatprep.subr.bf16.mxu0 0
    %559 = vmatpush1.bf16.msra.mxu0 0
    %560 = vmatprep.subr.bf16.mxu0 0
    %561 = vmatpush1.bf16.msra.mxu0 0
    %562 = vmatprep.subr.bf16.mxu0 0
    %563 = vmatpush1.bf16.msra.mxu0 0
    %564 = vmatprep.subr.bf16.mxu0 0
    %565 = vmatpush1.bf16.msra.mxu0 0
    %566 = vmatprep.subr.bf16.mxu0 0
    %567 = vmatpush1.bf16.msra.mxu0 0
    %568 = vmatprep.subr.bf16.mxu0 0
    %569 = vmatpush1.bf16.msra.mxu0 0
    %570 = vmatprep.subr.bf16.mxu0 0
    %571 = vmatpush1.bf16.msra.mxu0 0
    %572 = vmatprep.mubr.bf16.mxu0 0
    %573 = vmatmul.mubr.bf16.gmra.mrb[0].mxu0 %v474
    %v574 = vpop.f32.mrb[0].mxu0
    %v575 = vadd.f32 %v491, %v574
    %v576 = vpop.f32.mrb[0].mxu0
    %v577 = vpop.f32.mrb[0].mxu0
    %v578 = vpop.f32.mrb[0].mxu0
    %579 = vdwg.mxu0
    %v580 = vmax.f32 %v575, 0.0
    %v581 = vpack.c.bf16 %v580, %v580
    %s582 = scalar_lea.vmem [#allocation7], 64
    %v583 = vld [vmem:[%s582] sm:$0xf]
    %v584 = vld [vmem:[%s582 + $0x4] sm:$0xf]
    %v585 = vld [vmem:[%s582 + $0x8] sm:$0xf]
    %v586 = vld [vmem:[%s582 + $0xc] sm:$0xf]
    %v587 = vld [vmem:[%s582 + $0x10] sm:$0xf]
    %v588 = vld [vmem:[%s582 + $0x14] sm:$0xf]
    %v589 = vld [vmem:[%s582 + $0x18] sm:$0xf]
    %v590 = vld [vmem:[%s582 + $0x1c] sm:$0xf]
    %v591 = vld [vmem:[%s582 + $0x20] sm:$0xf]
    %v592 = vld [vmem:[%s582 + $0x24] sm:$0xf]
    %v593 = vld [vmem:[%s582 + $0x28] sm:$0xf]
    %v594 = vld [vmem:[%s582 + $0x2c] sm:$0xf]
    %v595 = vld [vmem:[%s582 + $0x30] sm:$0xf]
    %v596 = vld [vmem:[%s582 + $0x34] sm:$0xf]
    %v597 = vld [vmem:[%s582 + $0x38] sm:$0xf]
    %v598 = vld [vmem:[%s582 + $0x3c] sm:$0xf]
    %s599 = scalar_lea.vmem [#allocation9], 1
    %v600 = vld [vmem:[%s599] sm:$0x1]
    %v617 = vunpack.c.l.b16 %v583
    %v618 = vunpack.c.l.b16 %v584
    %v619 = vunpack.c.l.b16 %v585
    %v620 = vunpack.c.l.b16 %v586
    %v621 = vunpack.c.l.b16 %v587
    %v622 = vunpack.c.l.b16 %v588
    %v623 = vunpack.c.l.b16 %v589
    %v624 = vunpack.c.l.b16 %v590
    %v625 = vunpack.c.l.b16 %v591
    %v626 = vunpack.c.l.b16 %v592
    %v627 = vunpack.c.l.b16 %v593
    %v628 = vunpack.c.l.b16 %v594
    %v629 = vunpack.c.l.b16 %v595
    %v630 = vunpack.c.l.b16 %v596
    %v631 = vunpack.c.l.b16 %v597
    %v632 = vunpack.c.l.b16 %v598
    %v633 = vpack.c.b16 %v618, %v617
    %v634 = vpack.c.b16 %v620, %v619
    %v635 = vpack.c.b16 %v622, %v621
    %v636 = vpack.c.b16 %v624, %v623
    %v637 = vpack.c.b16 %v626, %v625
    %v638 = vpack.c.b16 %v628, %v627
    %v639 = vpack.c.b16 %v630, %v629
    %v640 = vpack.c.b16 %v632, %v631
    %649 = vmatprep.subr.bf16.mxu0 0
    %650 = vmatpush1.bf16.msra.mxu0 %v633
    %651 = vmatprep.subr.bf16.mxu0 0
    %652 = vmatpush1.bf16.msra.mxu0 %v634
    %653 = vmatprep.subr.bf16.mxu0 0
    %654 = vmatpush1.bf16.msra.mxu0 %v635
    %655 = vmatprep.subr.bf16.mxu0 0
    %656 = vmatpush1.bf16.msra.mxu0 %v636
    %657 = vmatprep.subr.bf16.mxu0 0
    %658 = vmatpush1.bf16.msra.mxu0 %v637
    %659 = vmatprep.subr.bf16.mxu0 0
    %660 = vmatpush1.bf16.msra.mxu0 %v638
    %661 = vmatprep.subr.bf16.mxu0 0
    %662 = vmatpush1.bf16.msra.mxu0 %v639
    %663 = vmatprep.subr.bf16.mxu0 0
    %664 = vmatpush1.bf16.msra.mxu0 %v640
    %665 = vmatprep.subr.bf16.mxu0 0
    %666 = vmatpush1.bf16.msra.mxu0 0
    %667 = vmatprep.subr.bf16.mxu0 0
    %668 = vmatpush1.bf16.msra.mxu0 0
    %669 = vmatprep.subr.bf16.mxu0 0
    %670 = vmatpush1.bf16.msra.mxu0 0
    %671 = vmatprep.subr.bf16.mxu0 0
    %672 = vmatpush1.bf16.msra.mxu0 0
    %673 = vmatprep.subr.bf16.mxu0 0
    %674 = vmatpush1.bf16.msra.mxu0 0
    %675 = vmatprep.subr.bf16.mxu0 0
    %676 = vmatpush1.bf16.msra.mxu0 0
    %677 = vmatprep.subr.bf16.mxu0 0
    %678 = vmatpush1.bf16.msra.mxu0 0
    %679 = vmatprep.subr.bf16.mxu0 0
    %680 = vmatpush1.bf16.msra.mxu0 0
    %681 = vmatprep.mubr.bf16.mxu0 0
    %682 = vmatmul.mubr.bf16.gmra.mrb[0].mxu0 %v581
    %v683 = vpop.f32.mrb[0].mxu0
    %v684 = vadd.f32 %v600, %v683
    %v685 = vpop.f32.mrb[0].mxu0
    %v686 = vpop.f32.mrb[0].mxu0
    %v687 = vpop.f32.mrb[0].mxu0
    %688 = vdwg.mxu0
    %v689 = vmax.f32 %v684, 0.0
    %v690 = vpack.c.bf16 %v689, %v689
    %s691 = scalar_lea.vmem [#allocation7], 128
    %v692 = vld [vmem:[%s691] sm:$0xf]
    %v693 = vld [vmem:[%s691 + $0x4] sm:$0xf]
    %v694 = vld [vmem:[%s691 + $0x8] sm:$0xf]
    %v695 = vld [vmem:[%s691 + $0xc] sm:$0xf]
    %v696 = vld [vmem:[%s691 + $0x10] sm:$0xf]
    %v697 = vld [vmem:[%s691 + $0x14] sm:$0xf]
    %v698 = vld [vmem:[%s691 + $0x18] sm:$0xf]
    %v699 = vld [vmem:[%s691 + $0x1c] sm:$0xf]
    %v700 = vld [vmem:[%s691 + $0x20] sm:$0xf]
    %v701 = vld [vmem:[%s691 + $0x24] sm:$0xf]
    %v702 = vld [vmem:[%s691 + $0x28] sm:$0xf]
    %v703 = vld [vmem:[%s691 + $0x2c] sm:$0xf]
    %v704 = vld [vmem:[%s691 + $0x30] sm:$0xf]
    %v705 = vld [vmem:[%s691 + $0x34] sm:$0xf]
    %v706 = vld [vmem:[%s691 + $0x38] sm:$0xf]
    %v707 = vld [vmem:[%s691 + $0x3c] sm:$0xf]
    %s708 = scalar_lea.vmem [#allocation9], 2
    %v709 = vld [vmem:[%s708] sm:$0x1]
    %v726 = vunpack.c.l.b16 %v692
    %v727 = vunpack.c.l.b16 %v693
    %v728 = vunpack.c.l.b16 %v694
    %v729 = vunpack.c.l.b16 %v695
    %v730 = vunpack.c.l.b16 %v696
    %v731 = vunpack.c.l.b16 %v697
    %v732 = vunpack.c.l.b16 %v698
    %v733 = vunpack.c.l.b16 %v699
    %v734 = vunpack.c.l.b16 %v700
    %v735 = vunpack.c.l.b16 %v701
    %v736 = vunpack.c.l.b16 %v702
    %v737 = vunpack.c.l.b16 %v703
    %v738 = vunpack.c.l.b16 %v704
    %v739 = vunpack.c.l.b16 %v705
    %v740 = vunpack.c.l.b16 %v706
    %v741 = vunpack.c.l.b16 %v707
    %v742 = vpack.c.b16 %v727, %v726
    %v743 = vpack.c.b16 %v729, %v728
    %v744 = vpack.c.b16 %v731, %v730
    %v745 = vpack.c.b16 %v733, %v732
    %v746 = vpack.c.b16 %v735, %v734
    %v747 = vpack.c.b16 %v737, %v736
    %v748 = vpack.c.b16 %v739, %v738
    %v749 = vpack.c.b16 %v741, %v740
    %758 = vmatprep.subr.bf16.mxu0 0
    %759 = vmatpush1.bf16.msra.mxu0 %v742
    %760 = vmatprep.subr.bf16.mxu0 0
    %761 = vmatpush1.bf16.msra.mxu0 %v743
    %762 = vmatprep.subr.bf16.mxu0 0
    %763 = vmatpush1.bf16.msra.mxu0 %v744
    %764 = vmatprep.subr.bf16.mxu0 0
    %765 = vmatpush1.bf16.msra.mxu0 %v745
    %766 = vmatprep.subr.bf16.mxu0 0
    %767 = vmatpush1.bf16.msra.mxu0 %v746
    %768 = vmatprep.subr.bf16.mxu0 0
    %769 = vmatpush1.bf16.msra.mxu0 %v747
    %770 = vmatprep.subr.bf16.mxu0 0
    %771 = vmatpush1.bf16.msra.mxu0 %v748
    %772 = vmatprep.subr.bf16.mxu0 0
    %773 = vmatpush1.bf16.msra.mxu0 %v749
    %774 = vmatprep.subr.bf16.mxu0 0
    %775 = vmatpush1.bf16.msra.mxu0 0
    %776 = vmatprep.subr.bf16.mxu0 0
    %777 = vmatpush1.bf16.msra.mxu0 0
    %778 = vmatprep.subr.bf16.mxu0 0
    %779 = vmatpush1.bf16.msra.mxu0 0
    %780 = vmatprep.subr.bf16.mxu0 0
    %781 = vmatpush1.bf16.msra.mxu0 0
    %782 = vmatprep.subr.bf16.mxu0 0
    %783 = vmatpush1.bf16.msra.mxu0 0
    %784 = vmatprep.subr.bf16.mxu0 0
    %785 = vmatpush1.bf16.msra.mxu0 0
    %786 = vmatprep.subr.bf16.mxu0 0
    %787 = vmatpush1.bf16.msra.mxu0 0
    %788 = vmatprep.subr.bf16.mxu0 0
    %789 = vmatpush1.bf16.msra.mxu0 0
    %790 = vmatprep.mubr.bf16.mxu0 0
    %791 = vmatmul.mubr.bf16.gmra.mrb[0].mxu0 %v690
    %v792 = vpop.f32.mrb[0].mxu0
    %v793 = vadd.f32 %v709, %v792
    %v794 = vpop.f32.mrb[0].mxu0
    %v795 = vpop.f32.mrb[0].mxu0
    %v796 = vpop.f32.mrb[0].mxu0
    %797 = vdwg.mxu0
    %798 = vst [vmem:[%s13] sm:$0x1] %v793
    // Predicated region
    $region74: #{film_ar_layer_forward.1} parent=1 // pred_check
      _
    $region75: #{film_ar_layer_forward.1} parent=1 // pred_check_branch
      %800 = sbr.rel (0) target = $region77
    $region76: #{film_ar_layer_forward.1} parent=1 // pred_region
      _
    $region77: #{film_ar_layer_forward.1} parent=1 // pred_fallthru
      _
    // Predicated region
    $region78: #{film_ar_layer_forward.1} parent=1 // pred_check
      _
    $region79: #{film_ar_layer_forward.1} parent=1 // pred_check_branch
      %802 = sbr.rel (0) target = $region81
    $region80: #{film_ar_layer_forward.1} parent=1 // pred_region
      _
    $region81: #{film_ar_layer_forward.1} parent=1 // pred_fallthru
      _
    %803 = vsyncpa [#allocation3], 1
    %804 = vsyncpa [#allocation5], 1
    %805 = vsyncpa [#allocation8], 1

</llo_original>
